<compile_context>
chip_gen: v7x
topology: tpu7x:2x2x1
jax: 0.10.0
libtpu: 0.0.40
codegen_flags: <defaults>
</compile_context>

<pallas_src>
import numpy as np
import jax
import jax.numpy as jnp
from jax.experimental import pallas as pl
from jax.experimental.pallas import tpu as pltpu

EPS = 1e-5


# ----------------------------------------------------------------------------
# Kernel
# ----------------------------------------------------------------------------
def basic_block_kernel(x_ref, w1_ref, b1_ref, w2_ref, b2_ref, o_ref):
    """Fused BasicBlock forward for one image (one grid step).

    x_ref  : (1, H, W*Cin)        input rows, channels contiguous per pixel
    w1_ref : (3, W*Cin, 2*W*P)    conv1 (+BN) Toeplitz weights, shortcut (+BN)
                                  fused into the kh=1 matrix's upper columns
    b1_ref : (1, 2*W*P)           [conv1 bias | shortcut bias], pre-broadcast
    w2_ref : (3, W*P, W*P)        conv2 (+BN) Toeplitz weights
    b2_ref : (1, W*P)             conv2 bias, pre-broadcast
    o_ref  : (1, H, W*P)          output (lane-dense, W*P = 128 here)
    """
    H = x_ref.shape[1]
    WP = o_ref.shape[2]  # W * P

    def conv_rows(inp, w_ref, out_cols):
        # Three Toeplitz matmuls; vertical zero-padding realized with
        # pltpu.roll (XLU slot) + iota edge masks (VPU) -- no scratch, no pad.
        t0 = jnp.dot(inp, w_ref[0], preferred_element_type=jnp.float32)
        t1 = jnp.dot(inp, w_ref[1], preferred_element_type=jnp.float32)
        t2 = jnp.dot(inp, w_ref[2], preferred_element_type=jnp.float32)
        rows = jax.lax.broadcasted_iota(jnp.int32, (H, out_cols), 0)
        down = jnp.where(rows >= 1, pltpu.roll(t0, 1, axis=0), 0.0)
        up = jnp.where(rows < H - 1, pltpu.roll(t2, H - 1, axis=0), 0.0)
        return t1 + down + up

    x = x_ref[0]                                        # (H, W*Cin)

    # conv1 + BN + (fused) shortcut conv + BN
    r1 = conv_rows(x, w1_ref, 2 * WP) + b1_ref[...]     # (H, 2*W*P) f32
    y1 = jnp.maximum(r1[:, :WP], 0.0)                   # conv1 -> ReLU
    sc = r1[:, WP:]                                     # shortcut branch (no ReLU)

    # conv2 + BN (no ReLU), operands cast to the matmul dtype (bf16 path)
    y2 = conv_rows(y1.astype(w2_ref.dtype), w2_ref, WP) + b2_ref[...]

    # residual add + final ReLU  (f32 elementwise; lane-dense store)
    o_ref[0] = jnp.maximum(y2 + sc, 0.0)


# ----------------------------------------------------------------------------
# One-time parameter preparation (init-time, out of the per-call hot path)
# ----------------------------------------------------------------------------
def _fold_bn(w_oihw, bn):
    gamma, beta, mean, var = bn
    scale = gamma / jnp.sqrt(var + EPS)
    return w_oihw * scale[:, None, None, None], beta - mean * scale


def prepare_basic_block(params, H, W, matmul_dtype=jnp.float32):
    """Fold BN and build Toeplitz-expanded, shortcut-fused weight matrices."""
    # stride=1 only (see TODO above).
    w1f, b1f = _fold_bn(params['w1'], params['bn1'])     # (P, Cin, 3, 3)
    w2f, b2f = _fold_bn(params['w2'], params['bn2'])     # (P, P, 3, 3)
    P, Cin = int(w1f.shape[0]), int(w1f.shape[1])

    if 'ws' in params:                                   # conv 1x1 shortcut path
        wsf, bsf = _fold_bn(params['ws'], params['bns'])
        wsf = wsf[:, :, 0, 0]                            # (P, Cin)
    else:                                                # identity shortcut
        assert Cin == P, "identity shortcut needs Cin == planes"
        wsf, bsf = jnp.eye(P, dtype=jnp.float32), jnp.zeros((P,), jnp.float32)

    w1np, w2np, wsnp = np.asarray(w1f), np.asarray(w2f), np.asarray(wsf)

    # conv1 + shortcut fused Toeplitz weights: (3, W*Cin, 2*W*P)
    w1t = np.zeros((3, W * Cin, 2 * W * P), np.float32)
    for kh in range(3):
        for kw in range(3):
            blk = w1np[:, :, kh, kw].T                   # (Cin, P)
            for wo in range(W):
                wi = wo + kw - 1
                if 0 <= wi < W:
                    w1t[kh, wi * Cin:(wi + 1) * Cin, wo * P:(wo + 1) * P] = blk
    for wo in range(W):                                  # shortcut: center row, upper cols
        w1t[1, wo * Cin:(wo + 1) * Cin,
            W * P + wo * P:W * P + (wo + 1) * P] = wsnp.T

    # conv2 Toeplitz weights: (3, W*P, W*P)
    w2t = np.zeros((3, W * P, W * P), np.float32)
    for kh in range(3):
        for kw in range(3):
            blk = w2np[:, :, kh, kw].T                   # (Pin, Pout)
            for wo in range(W):
                wi = wo + kw - 1
                if 0 <= wi < W:
                    w2t[kh, wi * P:(wi + 1) * P, wo * P:(wo + 1) * P] = blk

    # Pre-broadcast biases to full lane rows (avoid in-kernel re-broadcasts).
    b1s = np.concatenate([np.tile(np.asarray(b1f), W), np.tile(np.asarray(bsf), W)])
    b2b = np.tile(np.asarray(b2f), W)

    return {
        'w1t': jnp.asarray(w1t, matmul_dtype),
        'w2t': jnp.asarray(w2t, matmul_dtype),
        'b1s': jnp.asarray(b1s, jnp.float32).reshape(1, 2 * W * P),
        'b2b': jnp.asarray(b2b, jnp.float32).reshape(1, W * P),
        'Cin': Cin, 'P': P, 'H': H, 'W': W, 'matmul_dtype': matmul_dtype,
    }


# ----------------------------------------------------------------------------
# Forward wrapper
# ----------------------------------------------------------------------------
def basic_block_forward(x_nchw, prep):
    H, W, Cin, P = prep['H'], prep['W'], prep['Cin'], prep['P']
    N = x_nchw.shape[0]
    assert x_nchw.shape == (N, Cin, H, W), x_nchw.shape

    # NCHW -> (N, H, W*Cin). In a full ResNet keep activations in this layout
    # end-to-end to avoid the boundary transposes.
    x = jnp.transpose(x_nchw, (0, 2, 3, 1)).reshape(N, H, W * Cin)
    x = x.astype(prep['matmul_dtype'])

    flops = 2 * N * H * (3 * (W * Cin) * (2 * W * P) + 3 * (W * P) * (W * P))
    bytes_accessed = int(
        x.size * x.dtype.itemsize
        + prep['w1t'].size * prep['w1t'].dtype.itemsize
        + prep['w2t'].size * prep['w2t'].dtype.itemsize
        + prep['b1s'].size * 4 + prep['b2b'].size * 4
        + N * H * W * P * 4)

    out = pl.pallas_call(
        basic_block_kernel,
        out_shape=jax.ShapeDtypeStruct((N, H, W * P), jnp.float32),
        grid=(N,),
        in_specs=[
            pl.BlockSpec((1, H, W * Cin), lambda n: (n, 0, 0)),
            pl.BlockSpec((3, W * Cin, 2 * W * P), lambda n: (0, 0, 0)),
            pl.BlockSpec((1, 2 * W * P), lambda n: (0, 0)),
            pl.BlockSpec((3, W * P, W * P), lambda n: (0, 0, 0)),
            pl.BlockSpec((1, W * P), lambda n: (0, 0)),
        ],
        out_specs=pl.BlockSpec((1, H, W * P), lambda n: (n, 0, 0)),
        compiler_params=pltpu.CompilerParams(dimension_semantics=("parallel",)),
        cost_estimate=pl.CostEstimate(flops=flops, transcendentals=0,
                                      bytes_accessed=bytes_accessed),
    )(x, prep['w1t'], prep['b1s'], prep['w2t'], prep['b2b'])

    # (N, H, W*P) -> NCHW for the PyTorch-facing interface.
    return jnp.transpose(out.reshape(N, H, W, P), (0, 3, 1, 2))


# ----------------------------------------------------------------------------
# Pure-JAX reference (un-folded BN) for correctness checking
# ----------------------------------------------------------------------------
def ref_forward(x, params):
    def conv(x, w, stride, pad):
        return jax.lax.conv_general_dilated(
            x, w, window_strides=(stride, stride),
            padding=[(pad, pad), (pad, pad)],
            dimension_numbers=('NCHW', 'OIHW', 'NCHW'))

    def bn(x, p):
        gamma, beta, mean, var = p
        s = gamma / jnp.sqrt(var + EPS)
        return x * s[None, :, None, None] + (beta - mean * s)[None, :, None, None]

    y = jax.nn.relu(bn(conv(x, params['w1'], 1, 1), params['bn1']))
    y = bn(conv(y, params['w2'], 1, 1), params['bn2'])
    sc = bn(conv(x, params['ws'], 1, 0), params['bns'])
    return jax.nn.relu(y + sc)


if __name__ == "__main__":
    key = jax.random.PRNGKey(0)
    ks = jax.random.split(key, 8)

    in_feature, planes = 4, 8        # Cin != planes -> 1x1 conv shortcut path
    N, H, W = 2, 16, 16

    def bn_params(k, c):
        k1, k2, k3, k4 = jax.random.split(k, 4)
        gamma = jax.random.uniform(k1, (c,), jnp.float32, 0.5, 1.5)
        beta = jax.random.normal(k2, (c,), jnp.float32) * 0.1
        mean = jax.random.normal(k3, (c,), jnp.float32) * 0.1
        var = jax.random.uniform(k4, (c,), jnp.float32, 0.5, 1.5)
        return gamma, beta, mean, var

    params = {
        'w1': jax.random.normal(ks[0], (planes, in_feature, 3, 3), jnp.float32) * 0.1,
        'bn1': bn_params(ks[1], planes),
        'w2': jax.random.normal(ks[2], (planes, planes, 3, 3), jnp.float32) * 0.1,
        'bn2': bn_params(ks[3], planes),
        'ws': jax.random.normal(ks[4], (planes, in_feature, 1, 1), jnp.float32) * 0.1,
        'bns': bn_params(ks[5], planes),
    }
    x = jax.random.normal(ks[6], (N, in_feature, H, W), jnp.float32)

    ref = jax.block_until_ready(ref_forward(x, params))

    # f32 path: strict accuracy.
    prep_f32 = prepare_basic_block(params, H, W, matmul_dtype=jnp.float32)
    out = jax.block_until_ready(basic_block_forward(x, prep_f32))
    assert out.shape == (N, planes, H, W), out.shape
    err = float(jnp.max(jnp.abs(out - ref)))
    assert jnp.allclose(out, ref, rtol=1e-4, atol=1e-4), f"f32 max abs err {err}"

    # bf16-operand path (v6e/v7x MXU): f32 accumulation, looser tolerance.
    prep_bf16 = prepare_basic_block(params, H, W, matmul_dtype=jnp.bfloat16)
    out_bf16 = jax.block_until_ready(basic_block_forward(x, prep_bf16))
    err_bf16 = float(jnp.max(jnp.abs(out_bf16 - ref)))
    assert jnp.allclose(out_bf16, ref, rtol=1e-1, atol=1e-1), \
        f"bf16 max abs err {err_bf16}"

    print("KERNEL_OK")
</pallas_src>

<mosaic_0001>
module attributes {stable_mosaic.version = 11 : i64} {
  func.func @basic_block_kernel(%arg0: i32, %arg1: memref<1x16x64xf32, #tpu.memory_space<vmem>>, %arg2: memref<3x64x256xf32, #tpu.memory_space<vmem>>, %arg3: memref<1x256xf32, #tpu.memory_space<vmem>>, %arg4: memref<3x128x128xf32, #tpu.memory_space<vmem>>, %arg5: memref<1x128xf32, #tpu.memory_space<vmem>>, %arg6: memref<1x16x128xf32, #tpu.memory_space<vmem>>) attributes {dimension_semantics = [#tpu.dimension_semantics<parallel>], iteration_bounds = array<i64: 2>, scalar_prefetch = 0 : i64, scratch_operands = 0 : i64, tpu.core_type = #tpu.core_type<tc>, window_params = [{transform_indices = @transform_0, window_bounds = array<i64: 1, 16, 64>}, {pipeline_mode = #tpu.pipeline_mode<synchronous>, transform_indices = @transform_1, window_bounds = array<i64: 3, 64, 256>}, {pipeline_mode = #tpu.pipeline_mode<synchronous>, transform_indices = @transform_2, window_bounds = array<i64: 1, 256>}, {pipeline_mode = #tpu.pipeline_mode<synchronous>, transform_indices = @transform_3, window_bounds = array<i64: 3, 128, 128>}, {pipeline_mode = #tpu.pipeline_mode<synchronous>, transform_indices = @transform_4, window_bounds = array<i64: 1, 128>}, {transform_indices = @transform_5, window_bounds = array<i64: 1, 16, 128>}]} {
    %c0 = arith.constant 0 : index
    %c0_0 = arith.constant 0 : index
    %c0_1 = arith.constant 0 : index
    %0 = vector.load %arg1[%c0, %c0_0, %c0_1] : memref<1x16x64xf32, #tpu.memory_space<vmem>>, vector<1x16x64xf32>
    %1 = vector.shape_cast %0 : vector<1x16x64xf32> to vector<16x64xf32>
    %c0_2 = arith.constant 0 : index
    %c0_3 = arith.constant 0 : index
    %c0_4 = arith.constant 0 : index
    %2 = vector.load %arg2[%c0_2, %c0_3, %c0_4] : memref<3x64x256xf32, #tpu.memory_space<vmem>>, vector<1x64x256xf32>
    %3 = vector.shape_cast %2 : vector<1x64x256xf32> to vector<64x256xf32>
    %cst = arith.constant dense<0.000000e+00> : vector<16x256xf32>
    %4 = tpu.matmul %1, %3, %cst {dimension_numbers = #tpu.dot_dimension_numbers<[1], [0], [0], [1], [0, 0, 1, 1], [], []>} : vector<16x64xf32>, vector<64x256xf32>, vector<16x256xf32> -> vector<16x256xf32>
    %c1 = arith.constant 1 : index
    %c0_5 = arith.constant 0 : index
    %c0_6 = arith.constant 0 : index
    %5 = vector.load %arg2[%c1, %c0_5, %c0_6] : memref<3x64x256xf32, #tpu.memory_space<vmem>>, vector<1x64x256xf32>
    %6 = vector.shape_cast %5 : vector<1x64x256xf32> to vector<64x256xf32>
    %cst_7 = arith.constant dense<0.000000e+00> : vector<16x256xf32>
    %7 = tpu.matmul %1, %6, %cst_7 {dimension_numbers = #tpu.dot_dimension_numbers<[1], [0], [0], [1], [0, 0, 1, 1], [], []>} : vector<16x64xf32>, vector<64x256xf32>, vector<16x256xf32> -> vector<16x256xf32>
    %c2 = arith.constant 2 : index
    %c0_8 = arith.constant 0 : index
    %c0_9 = arith.constant 0 : index
    %8 = vector.load %arg2[%c2, %c0_8, %c0_9] : memref<3x64x256xf32, #tpu.memory_space<vmem>>, vector<1x64x256xf32>
    %9 = vector.shape_cast %8 : vector<1x64x256xf32> to vector<64x256xf32>
    %cst_10 = arith.constant dense<0.000000e+00> : vector<16x256xf32>
    %10 = tpu.matmul %1, %9, %cst_10 {dimension_numbers = #tpu.dot_dimension_numbers<[1], [0], [0], [1], [0, 0, 1, 1], [], []>} : vector<16x64xf32>, vector<64x256xf32>, vector<16x256xf32> -> vector<16x256xf32>
    %11 = tpu.iota {dimensions = array<i32: 0>} : vector<16x256xi32>
    %c1_i32 = arith.constant 1 : i32
    %12 = vector.broadcast %c1_i32 : i32 to vector<16x256xi32>
    %13 = arith.cmpi sge, %11, %12 : vector<16x256xi32>
    %c1_i32_11 = arith.constant 1 : i32
    %14 = tpu.dynamic_rotate %4 by %c1_i32_11 dim 0 : vector<16x256xf32>, i32 -> vector<16x256xf32>
    %cst_12 = arith.constant 0.000000e+00 : f32
    %15 = vector.broadcast %cst_12 : f32 to vector<16x256xf32>
    %16 = arith.select %13, %14, %15 : vector<16x256xi1>, vector<16x256xf32>
    %c15_i32 = arith.constant 15 : i32
    %17 = vector.broadcast %c15_i32 : i32 to vector<16x256xi32>
    %18 = arith.cmpi slt, %11, %17 : vector<16x256xi32>
    %c15_i32_13 = arith.constant 15 : i32
    %19 = tpu.dynamic_rotate %10 by %c15_i32_13 dim 0 : vector<16x256xf32>, i32 -> vector<16x256xf32>
    %cst_14 = arith.constant 0.000000e+00 : f32
    %20 = vector.broadcast %cst_14 : f32 to vector<16x256xf32>
    %21 = arith.select %18, %19, %20 : vector<16x256xi1>, vector<16x256xf32>
    %22 = arith.addf %7, %16 : vector<16x256xf32>
    %23 = arith.addf %22, %21 : vector<16x256xf32>
    %c0_15 = arith.constant 0 : index
    %c0_16 = arith.constant 0 : index
    %24 = vector.load %arg3[%c0_15, %c0_16] : memref<1x256xf32, #tpu.memory_space<vmem>>, vector<1x256xf32>
    %25 = vector.broadcast %24 : vector<1x256xf32> to vector<16x256xf32>
    %26 = arith.addf %23, %25 : vector<16x256xf32>
    %27 = vector.extract_strided_slice %26 {offsets = [0, 0], sizes = [16, 128], strides = [1, 1]} : vector<16x256xf32> to vector<16x128xf32>
    %cst_17 = arith.constant 0.000000e+00 : f32
    %28 = vector.broadcast %cst_17 : f32 to vector<16x128xf32>
    %29 = arith.maximumf %27, %28 : vector<16x128xf32>
    %30 = vector.extract_strided_slice %26 {offsets = [0, 128], sizes = [16, 128], strides = [1, 1]} : vector<16x256xf32> to vector<16x128xf32>
    %c0_18 = arith.constant 0 : index
    %c0_19 = arith.constant 0 : index
    %c0_20 = arith.constant 0 : index
    %31 = vector.load %arg4[%c0_18, %c0_19, %c0_20] : memref<3x128x128xf32, #tpu.memory_space<vmem>>, vector<1x128x128xf32>
    %32 = vector.shape_cast %31 : vector<1x128x128xf32> to vector<128x128xf32>
    %cst_21 = arith.constant dense<0.000000e+00> : vector<16x128xf32>
    %33 = tpu.matmul %29, %32, %cst_21 {dimension_numbers = #tpu.dot_dimension_numbers<[1], [0], [0], [1], [0, 0, 1, 1], [], []>} : vector<16x128xf32>, vector<128x128xf32>, vector<16x128xf32> -> vector<16x128xf32>
    %c1_22 = arith.constant 1 : index
    %c0_23 = arith.constant 0 : index
    %c0_24 = arith.constant 0 : index
    %34 = vector.load %arg4[%c1_22, %c0_23, %c0_24] : memref<3x128x128xf32, #tpu.memory_space<vmem>>, vector<1x128x128xf32>
    %35 = vector.shape_cast %34 : vector<1x128x128xf32> to vector<128x128xf32>
    %cst_25 = arith.constant dense<0.000000e+00> : vector<16x128xf32>
    %36 = tpu.matmul %29, %35, %cst_25 {dimension_numbers = #tpu.dot_dimension_numbers<[1], [0], [0], [1], [0, 0, 1, 1], [], []>} : vector<16x128xf32>, vector<128x128xf32>, vector<16x128xf32> -> vector<16x128xf32>
    %c2_26 = arith.constant 2 : index
    %c0_27 = arith.constant 0 : index
    %c0_28 = arith.constant 0 : index
    %37 = vector.load %arg4[%c2_26, %c0_27, %c0_28] : memref<3x128x128xf32, #tpu.memory_space<vmem>>, vector<1x128x128xf32>
    %38 = vector.shape_cast %37 : vector<1x128x128xf32> to vector<128x128xf32>
    %cst_29 = arith.constant dense<0.000000e+00> : vector<16x128xf32>
    %39 = tpu.matmul %29, %38, %cst_29 {dimension_numbers = #tpu.dot_dimension_numbers<[1], [0], [0], [1], [0, 0, 1, 1], [], []>} : vector<16x128xf32>, vector<128x128xf32>, vector<16x128xf32> -> vector<16x128xf32>
    %40 = tpu.iota {dimensions = array<i32: 0>} : vector<16x128xi32>
    %c1_i32_30 = arith.constant 1 : i32
    %41 = vector.broadcast %c1_i32_30 : i32 to vector<16x128xi32>
    %42 = arith.cmpi sge, %40, %41 : vector<16x128xi32>
    %c1_i32_31 = arith.constant 1 : i32
    %43 = tpu.dynamic_rotate %33 by %c1_i32_31 dim 0 : vector<16x128xf32>, i32 -> vector<16x128xf32>
    %cst_32 = arith.constant 0.000000e+00 : f32
    %44 = vector.broadcast %cst_32 : f32 to vector<16x128xf32>
    %45 = arith.select %42, %43, %44 : vector<16x128xi1>, vector<16x128xf32>
    %c15_i32_33 = arith.constant 15 : i32
    %46 = vector.broadcast %c15_i32_33 : i32 to vector<16x128xi32>
    %47 = arith.cmpi slt, %40, %46 : vector<16x128xi32>
    %c15_i32_34 = arith.constant 15 : i32
    %48 = tpu.dynamic_rotate %39 by %c15_i32_34 dim 0 : vector<16x128xf32>, i32 -> vector<16x128xf32>
    %cst_35 = arith.constant 0.000000e+00 : f32
    %49 = vector.broadcast %cst_35 : f32 to vector<16x128xf32>
    %50 = arith.select %47, %48, %49 : vector<16x128xi1>, vector<16x128xf32>
    %51 = arith.addf %36, %45 : vector<16x128xf32>
    %52 = arith.addf %51, %50 : vector<16x128xf32>
    %c0_36 = arith.constant 0 : index
    %c0_37 = arith.constant 0 : index
    %53 = vector.load %arg5[%c0_36, %c0_37] : memref<1x128xf32, #tpu.memory_space<vmem>>, vector<1x128xf32>
    %54 = vector.broadcast %53 : vector<1x128xf32> to vector<16x128xf32>
    %55 = arith.addf %52, %54 : vector<16x128xf32>
    %56 = arith.addf %55, %30 : vector<16x128xf32>
    %cst_38 = arith.constant 0.000000e+00 : f32
    %57 = vector.broadcast %cst_38 : f32 to vector<16x128xf32>
    %58 = arith.maximumf %56, %57 : vector<16x128xf32>
    %c0_39 = arith.constant 0 : index
    %c0_40 = arith.constant 0 : index
    %c0_41 = arith.constant 0 : index
    %59 = vector.load %arg6[%c0_39, %c0_40, %c0_41] : memref<1x16x128xf32, #tpu.memory_space<vmem>>, vector<1x16x128xf32>
    %60 = vector.shape_cast %59 : vector<1x16x128xf32> to vector<16x128xf32>
    %61 = vector.shape_cast %58 : vector<16x128xf32> to vector<1x16x128xf32>
    tpu.vector_store %arg6[%c0_39, %c0_40, %c0_41], %61 {strides = array<i32>} : memref<1x16x128xf32, #tpu.memory_space<vmem>>, vector<1x16x128xf32>,
    return
  }
  func.func @transform_0(%arg0: i32) -> (i32, i32, i32) {
    %c0_i32 = arith.constant 0 : i32
    %c0_i32_0 = arith.constant 0 : i32
    %c0_i32_1 = arith.constant 0 : i32
    return %arg0, %c0_i32, %c0_i32_0 : i32, i32, i32
  }
  func.func @transform_1(%arg0: i32) -> (i32, i32, i32) {
    %c0_i32 = arith.constant 0 : i32
    %c0_i32_0 = arith.constant 0 : i32
    %c0_i32_1 = arith.constant 0 : i32
    %c0_i32_2 = arith.constant 0 : i32
    return %c0_i32, %c0_i32_0, %c0_i32_1 : i32, i32, i32
  }
  func.func @transform_2(%arg0: i32) -> (i32, i32) {
    %c0_i32 = arith.constant 0 : i32
    %c0_i32_0 = arith.constant 0 : i32
    %c0_i32_1 = arith.constant 0 : i32
    return %c0_i32, %c0_i32_0 : i32, i32
  }
  func.func @transform_3(%arg0: i32) -> (i32, i32, i32) {
    %c0_i32 = arith.constant 0 : i32
    %c0_i32_0 = arith.constant 0 : i32
    %c0_i32_1 = arith.constant 0 : i32
    %c0_i32_2 = arith.constant 0 : i32
    return %c0_i32, %c0_i32_0, %c0_i32_1 : i32, i32, i32
  }
  func.func @transform_4(%arg0: i32) -> (i32, i32) {
    %c0_i32 = arith.constant 0 : i32
    %c0_i32_0 = arith.constant 0 : i32
    %c0_i32_1 = arith.constant 0 : i32
    return %c0_i32, %c0_i32_0 : i32, i32
  }
  func.func @transform_5(%arg0: i32) -> (i32, i32, i32) {
    %c0_i32 = arith.constant 0 : i32
    %c0_i32_0 = arith.constant 0 : i32
    %c0_i32_1 = arith.constant 0 : i32
    return %arg0, %c0_i32, %c0_i32_0 : i32, i32, i32
  }
}

</mosaic_0001>

<llo_original>
// kernel: tpu_custom_call.1
$region0: #{tpu_custom_call.1}
  #allocation0 [shape = 'u32[]', space=smem, size = 0x4, offset = 0x4, fixed_abs, tag = 'smem constant byte address 0x4 - core index']
  #allocation1 [shape = 'u32[144,128]{1,0:T(1,128)}', space=vmem, size = 0x12000, scoped, tag = 'internal scratch']
  %s0 = inlined_call_operand.hbm [shape: f32[2,16,64], index: 0, kind: input, shape index: {}]
  %s1 = inlined_call_operand.hbm [shape: f32[3,64,256], index: 1, kind: input, shape index: {}]
  %s2 = inlined_call_operand.vmem [shape: f32[1,256], index: 2, kind: input, shape index: {}]
  %s3 = inlined_call_operand.hbm [shape: f32[3,128,128], index: 3, kind: input, shape index: {}]
  %s4 = inlined_call_operand.vmem [shape: f32[1,128], index: 4, kind: input, shape index: {}]
  %s5 = inlined_call_operand.hbm [shape: f32[2,16,128], index: 5, kind: output, shape index: {}]
  %s6 = sld [smem:[#allocation0]]
  $region65: #{tpu_custom_call.1} parent=0
    _
  %s8 = ssub.s32 1, %s6
  %s9 = scalar_select 0, %s8, %s6
  $region1: #{tpu_custom_call.1} parent=0
    #allocation2 [shape = 'u8[16384]{0}', space=vmem, size = 0x4000, scoped, tag = 'input window, operand 0']
    #allocation3 [shape = 's32[2]{0}', space=sflag, size = 0x8, scoped, tag = 'scoped memory for tpu_custom_call.1']
    #allocation4 [shape = 's32[2]{0}', space=sflag, size = 0x8, scoped, tag = 'scoped memory for tpu_custom_call.1']
    #allocation5 [shape = 'u8[196608]{0}', space=vmem, size = 0x30000, scoped, tag = 'input window, operand 1, single buffered']
    #allocation6 [shape = 's32[1]{0}', space=sflag, size = 0x4, scoped, tag = 'scoped memory for tpu_custom_call.1']
    #allocation7 [shape = 'u8[196608]{0}', space=vmem, size = 0x30000, scoped, tag = 'input window, operand 3, single buffered']
    #allocation8 [shape = 'u8[16384]{0}', space=vmem, size = 0x4000, scoped, tag = 'output window, operand 0']
    %10 = vsyncpa [#allocation3], 0
    %s11 = scalar_lea.sflag [#allocation3], 1
    %12 = vsyncpa %s11, 0
    %13 = vsyncpa [#allocation6], 0
    %14 = vsyncpa [#allocation4], 0
    %s15 = scalar_lea.sflag [#allocation4], 1
    %16 = vsyncpa %s15, 0
    loop: start=0, step=1, limit=4
    $region2: #{tpu_custom_call.1} parent=1 // loop_pre_header
      _
    $region3: #{tpu_custom_call.1} parent=1 // loop_header
      %s18 = sphi 0, %s22
      %p19 = scmp.ge.s32.totalorder %s18, 4
      %s28 = sphi 0, %s30
      %s31 = sphi 0, %s28
      %s32 = sphi 0, %s31
      %s48 = sphi 0, %s32
      %s52 = sphi 0, %s52
      %s54 = sphi 0, %s52
      %s55 = sphi 0, %s54
      %s69 = sphi 0, %s55
      %s73 = sphi 0, %s73
      %s75 = sphi 0, %s73
      %s76 = sphi 0, %s75
      %s90 = sphi 0, %s76
      %s94 = sphi 0, %s94
      %s96 = sphi 0, %s94
      %s97 = sphi 0, %s96
      %s111 = sphi 0, %s97
      %s115 = sphi 0, %s115
      %s117 = sphi 0, %s115
      %s118 = sphi 0, %s117
      %s132 = sphi 0, %s118
      %s138 = sphi 0, %s140
      %s141 = sphi 0, %s138
      %s142 = sphi 0, %s141
      %s158 = sphi 0, %s142
    $region4: #{tpu_custom_call.1} parent=1 // loop_header_branch
      %21 = sbr.rel (%p19) target = $region8
    $region5: #{tpu_custom_call.1} parent=1 // loop_body
      %s23 = ssub.s32 %s18, 1
      %s24 = ssub.s32 %s18, 2
      %s25 = sadd.s32 %s18, 1
      %s26 = ssub.s32 %s18, %s25
      %p27 = scmp.eq.s32.totalorder %s26, 0
      %s29 = sadd.s32 %s28, 1
      %s30 = scalar_select %p27, %s28, %s29
      %p33 = pneg %p27
      %p34 = scmp.eq.s32.totalorder %s18, 1
      %p35 = por %p33, %p34
      %p36 = scmp.ne.s32.totalorder %s28, %s31
      %p37 = scmp.eq.s32.totalorder %s18, 0
      %p38 = por %p36, %p37
      %p39 = scmp.ne.s32.totalorder %s28, %s31
      %p40 = scmp.eq.s32.totalorder %s23, 1
      %p41 = por %p39, %p40
      %p42 = scmp.ne.s32.totalorder %s31, %s32
      %p43 = scmp.eq.s32.totalorder %s23, 0
      %p44 = por %p42, %p43
      %p45 = scmp.ne.s32.totalorder %s31, %s32
      %p46 = scmp.eq.s32.totalorder %s24, 1
      %p47 = por %p45, %p46
      %p49 = scmp.ne.s32.totalorder %s32, %s48
      %p50 = scmp.eq.s32.totalorder %s24, 0
      %p51 = por %p49, %p50
      %s53 = sadd.s32 %s52, 1
      %p56 = scmp.eq.s32.totalorder %s18, 1
      %p57 = scmp.ne.s32.totalorder %s52, %s54
      %p58 = scmp.eq.s32.totalorder %s18, 0
      %p59 = por %p57, %p58
      %p60 = scmp.ne.s32.totalorder %s52, %s54
      %p61 = scmp.eq.s32.totalorder %s23, 1
      %p62 = por %p60, %p61
      %p63 = scmp.ne.s32.totalorder %s54, %s55
      %p64 = scmp.eq.s32.totalorder %s23, 0
      %p65 = por %p63, %p64
      %p66 = scmp.ne.s32.totalorder %s54, %s55
      %p67 = scmp.eq.s32.totalorder %s24, 1
      %p68 = por %p66, %p67
      %p70 = scmp.ne.s32.totalorder %s55, %s69
      %p71 = scmp.eq.s32.totalorder %s24, 0
      %p72 = por %p70, %p71
      %s74 = sadd.s32 %s73, 1
      %p77 = scmp.eq.s32.totalorder %s18, 1
      %p78 = scmp.ne.s32.totalorder %s73, %s75
      %p79 = scmp.eq.s32.totalorder %s18, 0
      %p80 = por %p78, %p79
      %p81 = scmp.ne.s32.totalorder %s73, %s75
      %p82 = scmp.eq.s32.totalorder %s23, 1
      %p83 = por %p81, %p82
      %p84 = scmp.ne.s32.totalorder %s75, %s76
      %p85 = scmp.eq.s32.totalorder %s23, 0
      %p86 = por %p84, %p85
      %p87 = scmp.ne.s32.totalorder %s75, %s76
      %p88 = scmp.eq.s32.totalorder %s24, 1
      %p89 = por %p87, %p88
      %p91 = scmp.ne.s32.totalorder %s76, %s90
      %p92 = scmp.eq.s32.totalorder %s24, 0
      %p93 = por %p91, %p92
      %s95 = sadd.s32 %s94, 1
      %p98 = scmp.eq.s32.totalorder %s18, 1
      %p99 = scmp.ne.s32.totalorder %s94, %s96
      %p100 = scmp.eq.s32.totalorder %s18, 0
      %p101 = por %p99, %p100
      %p102 = scmp.ne.s32.totalorder %s94, %s96
      %p103 = scmp.eq.s32.totalorder %s23, 1
      %p104 = por %p102, %p103
      %p105 = scmp.ne.s32.totalorder %s96, %s97
      %p106 = scmp.eq.s32.totalorder %s23, 0
      %p107 = por %p105, %p106
      %p108 = scmp.ne.s32.totalorder %s96, %s97
      %p109 = scmp.eq.s32.totalorder %s24, 1
      %p110 = por %p108, %p109
      %p112 = scmp.ne.s32.totalorder %s97, %s111
      %p113 = scmp.eq.s32.totalorder %s24, 0
      %p114 = por %p112, %p113
      %s116 = sadd.s32 %s115, 1
      %p119 = scmp.eq.s32.totalorder %s18, 1
      %p120 = scmp.ne.s32.totalorder %s115, %s117
      %p121 = scmp.eq.s32.totalorder %s18, 0
      %p122 = por %p120, %p121
      %p123 = scmp.ne.s32.totalorder %s115, %s117
      %p124 = scmp.eq.s32.totalorder %s23, 1
      %p125 = por %p123, %p124
      %p126 = scmp.ne.s32.totalorder %s117, %s118
      %p127 = scmp.eq.s32.totalorder %s23, 0
      %p128 = por %p126, %p127
      %p129 = scmp.ne.s32.totalorder %s117, %s118
      %p130 = scmp.eq.s32.totalorder %s24, 1
      %p131 = por %p129, %p130
      %p133 = scmp.ne.s32.totalorder %s118, %s132
      %p134 = scmp.eq.s32.totalorder %s24, 0
      %p135 = por %p133, %p134
      %s136 = ssub.s32 %s18, %s25
      %p137 = scmp.eq.s32.totalorder %s136, 0
      %s139 = sadd.s32 %s138, 1
      %s140 = scalar_select %p137, %s138, %s139
      %p143 = pneg %p137
      %p144 = scmp.eq.s32.totalorder %s18, 1
      %p145 = por %p143, %p144
      %p146 = scmp.ne.s32.totalorder %s138, %s141
      %p147 = scmp.eq.s32.totalorder %s18, 0
      %p148 = por %p146, %p147
      %p149 = scmp.ne.s32.totalorder %s138, %s141
      %p150 = scmp.eq.s32.totalorder %s23, 1
      %p151 = por %p149, %p150
      %p152 = scmp.ne.s32.totalorder %s141, %s142
      %p153 = scmp.eq.s32.totalorder %s23, 0
      %p154 = por %p152, %p153
      %p155 = scmp.ne.s32.totalorder %s141, %s142
      %p156 = scmp.eq.s32.totalorder %s24, 1
      %p157 = por %p155, %p156
      %p159 = scmp.ne.s32.totalorder %s142, %s158
      %p160 = scmp.eq.s32.totalorder %s24, 0
      %p161 = por %p159, %p160
      %p162 = scmp.le.s32.totalorder 1, %s18
      %p163 = scmp.lt.s32.totalorder %s18, 3
      %p164 = pnand %p162, %p163
      %p165 = pneg %p164
      // Predicated region
      $region9: #{tpu_custom_call.1} parent=5 // pred_check
        _
      $region10: #{tpu_custom_call.1} parent=5 // pred_check_branch
        %167 = sbr.rel (%p164) target = $region12
      $region11: #{tpu_custom_call.1} parent=5 // pred_region
        %s168 = ssub.s32 %s18, 1
        // Predicated region
        $region13: #{tpu_custom_call.1} parent=11 // pred_check
          %p169 = pneg %p65
        $region14: #{tpu_custom_call.1} parent=11 // pred_check_branch
          %171 = sbr.rel (%p169) target = $region16
        $region15: #{tpu_custom_call.1} parent=11 // pred_region
          %s173 = ssub.s32 6144, 6144
          %174 = vsyncadd [#allocation6], %s173
          %s175 = sshll.u32 [#allocation5], 4
          %s176 = int_to_ptr.vmem [resolvable:$true] %s175
          %181 = dma.hbm_to_vmem [thread:$0]  %s1, 6144, %s176, [#allocation6], 256, 256, 16
        $region16: #{tpu_custom_call.1} parent=11 // pred_fallthru
          _
        // Predicated region
        $region17: #{tpu_custom_call.1} parent=11 // pred_check
          %p182 = pneg %p86
        $region18: #{tpu_custom_call.1} parent=11 // pred_check_branch
          %184 = sbr.rel (%p182) target = $region20
        $region19: #{tpu_custom_call.1} parent=11 // pred_region
          _
        $region20: #{tpu_custom_call.1} parent=11 // pred_fallthru
          _
        // Predicated region
        $region21: #{tpu_custom_call.1} parent=11 // pred_check
          %p185 = pneg %p107
        $region22: #{tpu_custom_call.1} parent=11 // pred_check_branch
          %187 = sbr.rel (%p185) target = $region24
        $region23: #{tpu_custom_call.1} parent=11 // pred_region
          %s189 = ssub.s32 6144, 6144
          %190 = vsyncadd [#allocation6], %s189
          %s191 = sshll.u32 [#allocation7], 4
          %s192 = int_to_ptr.vmem [resolvable:$true] %s191
          %197 = dma.hbm_to_vmem [thread:$0]  %s3, 6144, %s192, [#allocation6], 128, 128, 8
        $region24: #{tpu_custom_call.1} parent=11 // pred_fallthru
          _
        // Predicated region
        $region25: #{tpu_custom_call.1} parent=11 // pred_check
          %p198 = pneg %p128
        $region26: #{tpu_custom_call.1} parent=11 // pred_check_branch
          %200 = sbr.rel (%p198) target = $region28
        $region27: #{tpu_custom_call.1} parent=11 // pred_region
          _
        $region28: #{tpu_custom_call.1} parent=11 // pred_fallthru
          _
      $region12: #{tpu_custom_call.1} parent=5 // pred_fallthru
        _
      %p201 = scmp.lt.s32.totalorder %s18, 2
      // Predicated region
      $region29: #{tpu_custom_call.1} parent=5 // pred_check
        %p202 = pneg %p201
      $region30: #{tpu_custom_call.1} parent=5 // pred_check_branch
        %204 = sbr.rel (%p202) target = $region32
      $region31: #{tpu_custom_call.1} parent=5 // pred_region
        // Predicated region
        $region33: #{tpu_custom_call.1} parent=31 // pred_check
          %p205 = pneg %p38
        $region34: #{tpu_custom_call.1} parent=31 // pred_check_branch
          %207 = sbr.rel (%p205) target = $region36
        $region35: #{tpu_custom_call.1} parent=31 // pred_region
          %s208 = sand.u32 %s28, 1
          %s209 = scalar_lea.sflag [#allocation3], %s208
          %s210 = sand.u32 %s28, 1
          %s211 = smul.addr %s210, 16
          %s212 = scalar_lea.vmem [#allocation2], %s211
          %s214 = ssub.s32 256, 256
          %215 = vsyncadd %s209, %s214
          %s216 = smul.addr %s18, 2
          %s217 = smul.addr %s216, 128
          %s218 = scalar_lea.hbm %s0, %s217
          %s219 = sshll.u32 %s212, 4
          %s220 = int_to_ptr.vmem [resolvable:$true] %s219
          %225 = dma.hbm_to_vmem [thread:$0]  %s218, 256, %s220, %s209, 128, 128, 8
        $region36: #{tpu_custom_call.1} parent=31 // pred_fallthru
          _
      $region32: #{tpu_custom_call.1} parent=5 // pred_fallthru
        _
      %p226 = scmp.le.s32.totalorder 1, %s18
      %p227 = scmp.lt.s32.totalorder %s18, 3
      %p228 = pnand %p226, %p227
      %p229 = pneg %p228
      // Predicated region
      $region37: #{tpu_custom_call.1} parent=5 // pred_check
        _
      $region38: #{tpu_custom_call.1} parent=5 // pred_check_branch
        %231 = sbr.rel (%p228) target = $region40
      $region39: #{tpu_custom_call.1} parent=5 // pred_region
        %s232 = ssub.s32 %s18, 1
        %s233 = sand.u32 %s31, 1
        %s234 = scalar_lea.sflag [#allocation3], %s233
        %s235 = sand.u32 %s31, 1
        %s236 = smul.addr %s235, 16
        %s237 = scalar_lea.vmem [#allocation2], %s236
        // Predicated region
        $region41: #{tpu_custom_call.1} parent=39 // pred_check
          %p238 = pneg %p44
        $region42: #{tpu_custom_call.1} parent=39 // pred_check_branch
          %240 = sbr.rel (%p238) target = $region44
        $region43: #{tpu_custom_call.1} parent=39 // pred_region
          %241 = dma.done %s234, 256
        $region44: #{tpu_custom_call.1} parent=39 // pred_fallthru
          _
        // Predicated region
        $region45: #{tpu_custom_call.1} parent=39 // pred_check
          %p242 = pneg %p65
        $region46: #{tpu_custom_call.1} parent=39 // pred_check_branch
          %244 = sbr.rel (%p242) target = $region48
        $region47: #{tpu_custom_call.1} parent=39 // pred_region
          %245 = dma.done [#allocation6], 6144
        $region48: #{tpu_custom_call.1} parent=39 // pred_fallthru
          _
        // Predicated region
        $region49: #{tpu_custom_call.1} parent=39 // pred_check
          %p246 = pneg %p107
        $region50: #{tpu_custom_call.1} parent=39 // pred_check_branch
          %248 = sbr.rel (%p246) target = $region52
        $region51: #{tpu_custom_call.1} parent=39 // pred_region
          %249 = dma.done [#allocation6], 6144
        $region52: #{tpu_custom_call.1} parent=39 // pred_fallthru
          _
        %s250 = sand.u32 %s31, 1
        %s251 = scalar_lea.sflag [#allocation3], %s250
        %s252 = sand.u32 %s31, 1
        %s253 = smul.addr %s252, 16
        %s254 = scalar_lea.vmem [#allocation2], %s253
        %p255 = pneg %p44
        %p256 = pneg %p41
        %p257 = pneg %p65
        %p258 = pneg %p62
        %p259 = pneg %p86
        %p260 = pneg %p83
        %p261 = pneg %p107
        %p262 = pneg %p104
        %p263 = pneg %p128
        %p264 = pneg %p125
        %p265 = pneg %p154
        %p266 = pneg %p151
        %s267 = sand.u32 %s141, 1
        %s268 = scalar_lea.sflag [#allocation4], %s267
        %s269 = sand.u32 %s141, 1
        %s270 = smul.addr %s269, 16
        %s271 = scalar_lea.vmem [#allocation8], %s270
        %v272 = vld [vmem:[%s237] sm:$0xff]
        %v273 = vld [vmem:[%s237 + $0x8] sm:$0xff]
        %v274 = vld [vmem:[#allocation5] sm:$0xff]
        %v275 = vld [vmem:[#allocation5 + $0x8] sm:$0xff]
        %v276 = vld [vmem:[#allocation5 + $0x10] sm:$0xff]
        %v277 = vld [vmem:[#allocation5 + $0x18] sm:$0xff]
        %v278 = vld [vmem:[#allocation5 + $0x20] sm:$0xff]
        %v279 = vld [vmem:[#allocation5 + $0x28] sm:$0xff]
        %v280 = vld [vmem:[#allocation5 + $0x30] sm:$0xff]
        %v281 = vld [vmem:[#allocation5 + $0x38] sm:$0xff]
        %v282 = vld [vmem:[#allocation5 + $0x40] sm:$0xff]
        %v283 = vld [vmem:[#allocation5 + $0x48] sm:$0xff]
        %v284 = vld [vmem:[#allocation5 + $0x50] sm:$0xff]
        %v285 = vld [vmem:[#allocation5 + $0x58] sm:$0xff]
        %v286 = vld [vmem:[#allocation5 + $0x60] sm:$0xff]
        %v287 = vld [vmem:[#allocation5 + $0x68] sm:$0xff]
        %v288 = vld [vmem:[#allocation5 + $0x70] sm:$0xff]
        %v289 = vld [vmem:[#allocation5 + $0x78] sm:$0xff]
        %vm290 = vcmask 523264
        %v292 = vsel %vm290, %v272, 0
        %v295 = vsel %vm290, %v273, 0
        %297 = vmatprep.subr.mxu0 %v275
        %298 = vmatpush1.msra.mxu0 %v274
        %299 = vmatprep.subr.mxu0 %v277
        %300 = vmatpush1.msra.mxu0 %v276
        %301 = vmatprep.subr.mxu0 %v279
        %302 = vmatpush1.msra.mxu0 %v278
        %303 = vmatprep.subr.mxu0 %v281
        %304 = vmatpush1.msra.mxu0 %v280
        %305 = vmatprep.subr.mxu0 %v283
        %306 = vmatpush1.msra.mxu0 %v282
        %307 = vmatprep.subr.mxu0 %v285
        %308 = vmatpush1.msra.mxu0 %v284
        %309 = vmatprep.subr.mxu0 %v287
        %310 = vmatpush1.msra.mxu0 %v286
        %311 = vmatprep.subr.mxu0 %v289
        %312 = vmatpush1.msra.mxu0 %v288
        %313 = vmatprep.subr.mxu0 0.0
        %314 = vmatpush1.msra.mxu0 0.0
        %315 = vmatprep.subr.mxu0 0.0
        %316 = vmatpush1.msra.mxu0 0.0
        %317 = vmatprep.subr.mxu0 0.0
        %318 = vmatpush1.msra.mxu0 0.0
        %319 = vmatprep.subr.mxu0 0.0
        %320 = vmatpush1.msra.mxu0 0.0
        %321 = vmatprep.subr.mxu0 0.0
        %322 = vmatpush1.msra.mxu0 0.0
        %323 = vmatprep.subr.mxu0 0.0
        %324 = vmatpush1.msra.mxu0 0.0
        %325 = vmatprep.subr.mxu0 0.0
        %326 = vmatpush1.msra.mxu0 0.0
        %327 = vmatprep.subr.mxu0 0.0
        %328 = vmatpush1.msra.mxu0 0.0
        %329 = vmatprep.subr.mxu0 0.0
        %330 = vmatpush1.msra.mxu0 0.0
        %331 = vmatprep.subr.mxu0 0.0
        %332 = vmatpush1.msra.mxu0 0.0
        %333 = vmatprep.subr.mxu0 0.0
        %334 = vmatpush1.msra.mxu0 0.0
        %335 = vmatprep.subr.mxu0 0.0
        %336 = vmatpush1.msra.mxu0 0.0
        %337 = vmatprep.subr.mxu0 0.0
        %338 = vmatpush1.msra.mxu0 0.0
        %339 = vmatprep.subr.mxu0 0.0
        %340 = vmatpush1.msra.mxu0 0.0
        %341 = vmatprep.subr.mxu0 0.0
        %342 = vmatpush1.msra.mxu0 0.0
        %343 = vmatprep.subr.mxu0 0.0
        %344 = vmatpush1.msra.mxu0 0.0
        %345 = vmatprep.subr.mxu0 0.0
        %346 = vmatpush1.msra.mxu0 0.0
        %347 = vmatprep.subr.mxu0 0.0
        %348 = vmatpush1.msra.mxu0 0.0
        %349 = vmatprep.subr.mxu0 0.0
        %350 = vmatpush1.msra.mxu0 0.0
        %351 = vmatprep.subr.mxu0 0.0
        %352 = vmatpush1.msra.mxu0 0.0
        %353 = vmatprep.subr.mxu0 0.0
        %354 = vmatpush1.msra.mxu0 0.0
        %355 = vmatprep.subr.mxu0 0.0
        %356 = vmatpush1.msra.mxu0 0.0
        %357 = vmatprep.subr.mxu0 0.0
        %358 = vmatpush1.msra.mxu0 0.0
        %359 = vmatprep.subr.mxu0 0.0
        %360 = vmatpush1.msra.mxu0 0.0
        %361 = vmatprep.mubr.f32.mxu0 0.0
        %362 = vmatmul.mubr.f32.gmra.mrb[0].mxu0 %v292
        %v363 = vpop.f32.mrb[0].mxu0
        %v364 = vadd.f32 0.0, %v363
        %v365 = vpop.f32.mrb[0].mxu0
        %v366 = vadd.f32 0.0, %v365
        %367 = vmatprep.mubr.f32.mxu0 0.0
        %368 = vmatmul.mubr.f32.gmra.mrb[0].mxu0 %v295
        %v369 = vpop.f32.mrb[0].mxu0
        %v370 = vadd.f32 0.0, %v369
        %v371 = vpop.f32.mrb[0].mxu0
        %v372 = vadd.f32 0.0, %v371
        %373 = vdwg.mxu0
        %s374 = scalar_lea.vmem [#allocation5], 128
        %v375 = vld [vmem:[%s374] sm:$0xff]
        %v376 = vld [vmem:[%s374 + $0x8] sm:$0xff]
        %v377 = vld [vmem:[%s374 + $0x10] sm:$0xff]
        %v378 = vld [vmem:[%s374 + $0x18] sm:$0xff]
        %v379 = vld [vmem:[%s374 + $0x20] sm:$0xff]
        %v380 = vld [vmem:[%s374 + $0x28] sm:$0xff]
        %v381 = vld [vmem:[%s374 + $0x30] sm:$0xff]
        %v382 = vld [vmem:[%s374 + $0x38] sm:$0xff]
        %v383 = vld [vmem:[%s374 + $0x40] sm:$0xff]
        %v384 = vld [vmem:[%s374 + $0x48] sm:$0xff]
        %v385 = vld [vmem:[%s374 + $0x50] sm:$0xff]
        %v386 = vld [vmem:[%s374 + $0x58] sm:$0xff]
        %v387 = vld [vmem:[%s374 + $0x60] sm:$0xff]
        %v388 = vld [vmem:[%s374 + $0x68] sm:$0xff]
        %v389 = vld [vmem:[%s374 + $0x70] sm:$0xff]
        %v390 = vld [vmem:[%s374 + $0x78] sm:$0xff]
        %s391 = scalar_lea.vmem [#allocation5], 256
        %v392 = vld [vmem:[%s391] sm:$0xff]
        %v393 = vld [vmem:[%s391 + $0x8] sm:$0xff]
        %v394 = vld [vmem:[%s391 + $0x10] sm:$0xff]
        %v395 = vld [vmem:[%s391 + $0x18] sm:$0xff]
        %v396 = vld [vmem:[%s391 + $0x20] sm:$0xff]
        %v397 = vld [vmem:[%s391 + $0x28] sm:$0xff]
        %v398 = vld [vmem:[%s391 + $0x30] sm:$0xff]
        %v399 = vld [vmem:[%s391 + $0x38] sm:$0xff]
        %v400 = vld [vmem:[%s391 + $0x40] sm:$0xff]
        %v401 = vld [vmem:[%s391 + $0x48] sm:$0xff]
        %v402 = vld [vmem:[%s391 + $0x50] sm:$0xff]
        %v403 = vld [vmem:[%s391 + $0x58] sm:$0xff]
        %v404 = vld [vmem:[%s391 + $0x60] sm:$0xff]
        %v405 = vld [vmem:[%s391 + $0x68] sm:$0xff]
        %v406 = vld [vmem:[%s391 + $0x70] sm:$0xff]
        %v407 = vld [vmem:[%s391 + $0x78] sm:$0xff]
        %408 = vmatprep.subr.mxu0 %v393
        %409 = vmatpush1.msra.mxu0 %v392
        %410 = vmatprep.subr.mxu0 %v395
        %411 = vmatpush1.msra.mxu0 %v394
        %412 = vmatprep.subr.mxu0 %v397
        %413 = vmatpush1.msra.mxu0 %v396
        %414 = vmatprep.subr.mxu0 %v399
        %415 = vmatpush1.msra.mxu0 %v398
        %416 = vmatprep.subr.mxu0 %v401
        %417 = vmatpush1.msra.mxu0 %v400
        %418 = vmatprep.subr.mxu0 %v403
        %419 = vmatpush1.msra.mxu0 %v402
        %420 = vmatprep.subr.mxu0 %v405
        %421 = vmatpush1.msra.mxu0 %v404
        %422 = vmatprep.subr.mxu0 %v407
        %423 = vmatpush1.msra.mxu0 %v406
        %424 = vmatprep.subr.mxu0 0.0
        %425 = vmatpush1.msra.mxu0 0.0
        %426 = vmatprep.subr.mxu0 0.0
        %427 = vmatpush1.msra.mxu0 0.0
        %428 = vmatprep.subr.mxu0 0.0
        %429 = vmatpush1.msra.mxu0 0.0
        %430 = vmatprep.subr.mxu0 0.0
        %431 = vmatpush1.msra.mxu0 0.0
        %432 = vmatprep.subr.mxu0 0.0
        %433 = vmatpush1.msra.mxu0 0.0
        %434 = vmatprep.subr.mxu0 0.0
        %435 = vmatpush1.msra.mxu0 0.0
        %436 = vmatprep.subr.mxu0 0.0
        %437 = vmatpush1.msra.mxu0 0.0
        %438 = vmatprep.subr.mxu0 0.0
        %439 = vmatpush1.msra.mxu0 0.0
        %440 = vmatprep.subr.mxu0 0.0
        %441 = vmatpush1.msra.mxu0 0.0
        %442 = vmatprep.subr.mxu0 0.0
        %443 = vmatpush1.msra.mxu0 0.0
        %444 = vmatprep.subr.mxu0 0.0
        %445 = vmatpush1.msra.mxu0 0.0
        %446 = vmatprep.subr.mxu0 0.0
        %447 = vmatpush1.msra.mxu0 0.0
        %448 = vmatprep.subr.mxu0 0.0
        %449 = vmatpush1.msra.mxu0 0.0
        %450 = vmatprep.subr.mxu0 0.0
        %451 = vmatpush1.msra.mxu0 0.0
        %452 = vmatprep.subr.mxu0 0.0
        %453 = vmatpush1.msra.mxu0 0.0
        %454 = vmatprep.subr.mxu0 0.0
        %455 = vmatpush1.msra.mxu0 0.0
        %456 = vmatprep.subr.mxu0 0.0
        %457 = vmatpush1.msra.mxu0 0.0
        %458 = vmatprep.subr.mxu0 0.0
        %459 = vmatpush1.msra.mxu0 0.0
        %460 = vmatprep.subr.mxu0 0.0
        %461 = vmatpush1.msra.mxu0 0.0
        %462 = vmatprep.subr.mxu0 0.0
        %463 = vmatpush1.msra.mxu0 0.0
        %464 = vmatprep.subr.mxu0 0.0
        %465 = vmatpush1.msra.mxu0 0.0
        %466 = vmatprep.subr.mxu0 0.0
        %467 = vmatpush1.msra.mxu0 0.0
        %468 = vmatprep.subr.mxu0 0.0
        %469 = vmatpush1.msra.mxu0 0.0
        %470 = vmatprep.subr.mxu0 0.0
        %471 = vmatpush1.msra.mxu0 0.0
        %472 = vmatprep.mubr.f32.mxu0 0.0
        %473 = vmatmul.mubr.f32.gmra.mrb[0].mxu0 %v292
        %v474 = vpop.f32.mrb[0].mxu0
        %v475 = vadd.f32 0.0, %v474
        %v476 = vpop.f32.mrb[0].mxu0
        %v477 = vadd.f32 0.0, %v476
        %478 = vmatprep.mubr.f32.mxu0 0.0
        %479 = vmatmul.mubr.f32.gmra.mrb[0].mxu0 %v295
        %v480 = vpop.f32.mrb[0].mxu0
        %v481 = vadd.f32 0.0, %v480
        %v482 = vpop.f32.mrb[0].mxu0
        %v483 = vadd.f32 0.0, %v482
        %484 = vdwg.mxu0
        %v485 = vlaneseq
        %v486 = vshrl.u32 %v485, 7
        %v487 = vadd.s32 %v486, 8
        %vm488 = vcmp.ge.s32.totalorder %v486, 1
        %vm489 = vcmp.ge.s32.totalorder %v487, 1
        %v490 = vrot.slane %v364, 7
        %v491 = vrot.slane %v366, 7
        %v492 = vrot.slane %v370, 7
        %v493 = vrot.slane %v372, 7
        %vm494 = vcmp.lt.s32.totalorder %v486, 1
        %v495 = vsel %vm494, %v490, %v492
        %v496 = vsel %vm494, %v491, %v493
        %v497 = vsel %vm494, %v492, %v490
        %v498 = vsel %vm494, %v493, %v491
        %v499 = vsel %vm488, %v497, 0.0
        %v500 = vsel %vm488, %v498, 0.0
        %v501 = vsel %vm489, %v495, 0.0
        %v502 = vsel %vm489, %v496, 0.0
        %vm503 = vcmp.lt.s32.totalorder %v486, 15
        %vm504 = vcmp.lt.s32.totalorder %v487, 15
        %v505 = vrot.slane %v475, 1
        %v506 = vrot.slane %v477, 1
        %v507 = vrot.slane %v481, 1
        %v508 = vrot.slane %v483, 1
        %vm509 = vcmp.lt.s32.totalorder %v486, 7
        %v510 = vsel %vm509, %v505, %v507
        %v511 = vsel %vm509, %v506, %v508
        %v512 = vsel %vm509, %v507, %v505
        %v513 = vsel %vm509, %v508, %v506
        %v514 = vsel %vm503, %v510, 0.0
        %v515 = vsel %vm503, %v511, 0.0
        %v516 = vsel %vm504, %v512, 0.0
        %v517 = vsel %vm504, %v513, 0.0
        %518 = vmatprep.subr.mxu0 %v376
        %519 = vmatpush1.msra.mxu0 %v375
        %520 = vmatprep.subr.mxu0 %v378
        %521 = vmatpush1.msra.mxu0 %v377
        %522 = vmatprep.subr.mxu0 %v380
        %523 = vmatpush1.msra.mxu0 %v379
        %524 = vmatprep.subr.mxu0 %v382
        %525 = vmatpush1.msra.mxu0 %v381
        %526 = vmatprep.subr.mxu0 %v384
        %527 = vmatpush1.msra.mxu0 %v383
        %528 = vmatprep.subr.mxu0 %v386
        %529 = vmatpush1.msra.mxu0 %v385
        %530 = vmatprep.subr.mxu0 %v388
        %531 = vmatpush1.msra.mxu0 %v387
        %532 = vmatprep.subr.mxu0 %v390
        %533 = vmatpush1.msra.mxu0 %v389
        %534 = vmatprep.subr.mxu0 0.0
        %535 = vmatpush1.msra.mxu0 0.0
        %536 = vmatprep.subr.mxu0 0.0
        %537 = vmatpush1.msra.mxu0 0.0
        %538 = vmatprep.subr.mxu0 0.0
        %539 = vmatpush1.msra.mxu0 0.0
        %540 = vmatprep.subr.mxu0 0.0
        %541 = vmatpush1.msra.mxu0 0.0
        %542 = vmatprep.subr.mxu0 0.0
        %543 = vmatpush1.msra.mxu0 0.0
        %544 = vmatprep.subr.mxu0 0.0
        %545 = vmatpush1.msra.mxu0 0.0
        %546 = vmatprep.subr.mxu0 0.0
        %547 = vmatpush1.msra.mxu0 0.0
        %548 = vmatprep.subr.mxu0 0.0
        %549 = vmatpush1.msra.mxu0 0.0
        %550 = vmatprep.subr.mxu0 0.0
        %551 = vmatpush1.msra.mxu0 0.0
        %552 = vmatprep.subr.mxu0 0.0
        %553 = vmatpush1.msra.mxu0 0.0
        %554 = vmatprep.subr.mxu0 0.0
        %555 = vmatpush1.msra.mxu0 0.0
        %556 = vmatprep.subr.mxu0 0.0
        %557 = vmatpush1.msra.mxu0 0.0
        %558 = vmatprep.subr.mxu0 0.0
        %559 = vmatpush1.msra.mxu0 0.0
        %560 = vmatprep.subr.mxu0 0.0
        %561 = vmatpush1.msra.mxu0 0.0
        %562 = vmatprep.subr.mxu0 0.0
        %563 = vmatpush1.msra.mxu0 0.0
        %564 = vmatprep.subr.mxu0 0.0
        %565 = vmatpush1.msra.mxu0 0.0
        %566 = vmatprep.subr.mxu0 0.0
        %567 = vmatpush1.msra.mxu0 0.0
        %568 = vmatprep.subr.mxu0 0.0
        %569 = vmatpush1.msra.mxu0 0.0
        %570 = vmatprep.subr.mxu0 0.0
        %571 = vmatpush1.msra.mxu0 0.0
        %572 = vmatprep.subr.mxu0 0.0
        %573 = vmatpush1.msra.mxu0 0.0
        %574 = vmatprep.subr.mxu0 0.0
        %575 = vmatpush1.msra.mxu0 0.0
        %576 = vmatprep.subr.mxu0 0.0
        %577 = vmatpush1.msra.mxu0 0.0
        %578 = vmatprep.subr.mxu0 0.0
        %579 = vmatpush1.msra.mxu0 0.0
        %580 = vmatprep.subr.mxu0 0.0
        %581 = vmatpush1.msra.mxu0 0.0
        %582 = vmatprep.mubr.f32.mxu0 0.0
        %583 = vmatmul.mubr.f32.gmra.mrb[0].mxu0 %v292
        %v584 = vpop.f32.mrb[0].mxu0
        %v585 = vadd.f32 %v499, %v584
        %v586 = vpop.f32.mrb[0].mxu0
        %v587 = vadd.f32 %v500, %v586
        %588 = vmatprep.mubr.f32.mxu0 0.0
        %589 = vmatmul.mubr.f32.gmra.mrb[0].mxu0 %v295
        %v590 = vpop.f32.mrb[0].mxu0
        %v591 = vadd.f32 %v501, %v590
        %v592 = vpop.f32.mrb[0].mxu0
        %v593 = vadd.f32 %v502, %v592
        %594 = vdwg.mxu0
        %v595 = vadd.f32 %v585, %v514
        %v596 = vadd.f32 %v587, %v515
        %v597 = vadd.f32 %v591, %v516
        %v598 = vadd.f32 %v593, %v517
        %v599 = vld [vmem:[%s2] sm:$0x3]
        %v601 = vlaneseq
        %v602 = vshrl.u32 %v601, 7
        %v603 = vsub.s32 0, %v602
        %v604 = vrot.slane %v599, %v603
        %v605 = vlaneseq
        %v606 = vshrl.u32 %v605, 7
        %v607 = vsub.s32 1, %v606
        %v608 = vrot.slane %v599, %v607
        %v611 = vadd.f32 %v595, %v604
        %v612 = vadd.f32 %v596, %v608
        %v613 = vadd.f32 %v597, %v604
        %v614 = vadd.f32 %v598, %v608
        %v615 = vmax.f32 %v611, 0.0
        %v616 = vmax.f32 %v613, 0.0
        %v617 = vld [vmem:[#allocation7] sm:$0xff]
        %v618 = vld [vmem:[#allocation7 + $0x8] sm:$0xff]
        %v619 = vld [vmem:[#allocation7 + $0x10] sm:$0xff]
        %v620 = vld [vmem:[#allocation7 + $0x18] sm:$0xff]
        %v621 = vld [vmem:[#allocation7 + $0x20] sm:$0xff]
        %v622 = vld [vmem:[#allocation7 + $0x28] sm:$0xff]
        %v623 = vld [vmem:[#allocation7 + $0x30] sm:$0xff]
        %v624 = vld [vmem:[#allocation7 + $0x38] sm:$0xff]
        %v625 = vld [vmem:[#allocation7 + $0x40] sm:$0xff]
        %v626 = vld [vmem:[#allocation7 + $0x48] sm:$0xff]
        %v627 = vld [vmem:[#allocation7 + $0x50] sm:$0xff]
        %v628 = vld [vmem:[#allocation7 + $0x58] sm:$0xff]
        %v629 = vld [vmem:[#allocation7 + $0x60] sm:$0xff]
        %v630 = vld [vmem:[#allocation7 + $0x68] sm:$0xff]
        %v631 = vld [vmem:[#allocation7 + $0x70] sm:$0xff]
        %v632 = vld [vmem:[#allocation7 + $0x78] sm:$0xff]
        %633 = vmatprep.subr.mxu0 0.0
        %634 = vmatpush1.msra.mxu0 %v617
        %635 = vmatprep.subr.mxu0 0.0
        %636 = vmatpush1.msra.mxu0 %v618
        %637 = vmatprep.subr.mxu0 0.0
        %638 = vmatpush1.msra.mxu0 %v619
        %639 = vmatprep.subr.mxu0 0.0
        %640 = vmatpush1.msra.mxu0 %v620
        %641 = vmatprep.subr.mxu0 0.0
        %642 = vmatpush1.msra.mxu0 %v621
        %643 = vmatprep.subr.mxu0 0.0
        %644 = vmatpush1.msra.mxu0 %v622
        %645 = vmatprep.subr.mxu0 0.0
        %646 = vmatpush1.msra.mxu0 %v623
        %647 = vmatprep.subr.mxu0 0.0
        %648 = vmatpush1.msra.mxu0 %v624
        %649 = vmatprep.subr.mxu0 0.0
        %650 = vmatpush1.msra.mxu0 %v625
        %651 = vmatprep.subr.mxu0 0.0
        %652 = vmatpush1.msra.mxu0 %v626
        %653 = vmatprep.subr.mxu0 0.0
        %654 = vmatpush1.msra.mxu0 %v627
        %655 = vmatprep.subr.mxu0 0.0
        %656 = vmatpush1.msra.mxu0 %v628
        %657 = vmatprep.subr.mxu0 0.0
        %658 = vmatpush1.msra.mxu0 %v629
        %659 = vmatprep.subr.mxu0 0.0
        %660 = vmatpush1.msra.mxu0 %v630
        %661 = vmatprep.subr.mxu0 0.0
        %662 = vmatpush1.msra.mxu0 %v631
        %663 = vmatprep.subr.mxu0 0.0
        %664 = vmatpush1.msra.mxu0 %v632
        %665 = vmatprep.subr.mxu0 0.0
        %666 = vmatpush1.msra.mxu0 0.0
        %667 = vmatprep.subr.mxu0 0.0
        %668 = vmatpush1.msra.mxu0 0.0
        %669 = vmatprep.subr.mxu0 0.0
        %670 = vmatpush1.msra.mxu0 0.0
        %671 = vmatprep.subr.mxu0 0.0
        %672 = vmatpush1.msra.mxu0 0.0
        %673 = vmatprep.subr.mxu0 0.0
        %674 = vmatpush1.msra.mxu0 0.0
        %675 = vmatprep.subr.mxu0 0.0
        %676 = vmatpush1.msra.mxu0 0.0
        %677 = vmatprep.subr.mxu0 0.0
        %678 = vmatpush1.msra.mxu0 0.0
        %679 = vmatprep.subr.mxu0 0.0
        %680 = vmatpush1.msra.mxu0 0.0
        %681 = vmatprep.subr.mxu0 0.0
        %682 = vmatpush1.msra.mxu0 0.0
        %683 = vmatprep.subr.mxu0 0.0
        %684 = vmatpush1.msra.mxu0 0.0
        %685 = vmatprep.subr.mxu0 0.0
        %686 = vmatpush1.msra.mxu0 0.0
        %687 = vmatprep.subr.mxu0 0.0
        %688 = vmatpush1.msra.mxu0 0.0
        %689 = vmatprep.subr.mxu0 0.0
        %690 = vmatpush1.msra.mxu0 0.0
        %691 = vmatprep.subr.mxu0 0.0
        %692 = vmatpush1.msra.mxu0 0.0
        %693 = vmatprep.subr.mxu0 0.0
        %694 = vmatpush1.msra.mxu0 0.0
        %695 = vmatprep.subr.mxu0 0.0
        %696 = vmatpush1.msra.mxu0 0.0
        %697 = vmatprep.mubr.f32.mxu0 0.0
        %698 = vmatmul.mubr.f32.gmra.mrb[0].mxu0 %v615
        %v699 = vpop.f32.mrb[0].mxu0
        %v700 = vadd.f32 0.0, %v699
        %v701 = vpop.f32.mrb[0].mxu0
        %702 = vmatprep.mubr.f32.mxu0 0.0
        %703 = vmatmul.mubr.f32.gmra.mrb[0].mxu0 %v616
        %v704 = vpop.f32.mrb[0].mxu0
        %v705 = vadd.f32 0.0, %v704
        %v706 = vpop.f32.mrb[0].mxu0
        %707 = vdwg.mxu0
        %s708 = scalar_lea.vmem [#allocation7], 128
        %v709 = vld [vmem:[%s708] sm:$0xff]
        %v710 = vld [vmem:[%s708 + $0x8] sm:$0xff]
        %v711 = vld [vmem:[%s708 + $0x10] sm:$0xff]
        %v712 = vld [vmem:[%s708 + $0x18] sm:$0xff]
        %v713 = vld [vmem:[%s708 + $0x20] sm:$0xff]
        %v714 = vld [vmem:[%s708 + $0x28] sm:$0xff]
        %v715 = vld [vmem:[%s708 + $0x30] sm:$0xff]
        %v716 = vld [vmem:[%s708 + $0x38] sm:$0xff]
        %v717 = vld [vmem:[%s708 + $0x40] sm:$0xff]
        %v718 = vld [vmem:[%s708 + $0x48] sm:$0xff]
        %v719 = vld [vmem:[%s708 + $0x50] sm:$0xff]
        %v720 = vld [vmem:[%s708 + $0x58] sm:$0xff]
        %v721 = vld [vmem:[%s708 + $0x60] sm:$0xff]
        %v722 = vld [vmem:[%s708 + $0x68] sm:$0xff]
        %v723 = vld [vmem:[%s708 + $0x70] sm:$0xff]
        %v724 = vld [vmem:[%s708 + $0x78] sm:$0xff]
        %s725 = scalar_lea.vmem [#allocation7], 256
        %v726 = vld [vmem:[%s725] sm:$0xff]
        %v727 = vld [vmem:[%s725 + $0x8] sm:$0xff]
        %v728 = vld [vmem:[%s725 + $0x10] sm:$0xff]
        %v729 = vld [vmem:[%s725 + $0x18] sm:$0xff]
        %v730 = vld [vmem:[%s725 + $0x20] sm:$0xff]
        %v731 = vld [vmem:[%s725 + $0x28] sm:$0xff]
        %v732 = vld [vmem:[%s725 + $0x30] sm:$0xff]
        %v733 = vld [vmem:[%s725 + $0x38] sm:$0xff]
        %v734 = vld [vmem:[%s725 + $0x40] sm:$0xff]
        %v735 = vld [vmem:[%s725 + $0x48] sm:$0xff]
        %v736 = vld [vmem:[%s725 + $0x50] sm:$0xff]
        %v737 = vld [vmem:[%s725 + $0x58] sm:$0xff]
        %v738 = vld [vmem:[%s725 + $0x60] sm:$0xff]
        %v739 = vld [vmem:[%s725 + $0x68] sm:$0xff]
        %v740 = vld [vmem:[%s725 + $0x70] sm:$0xff]
        %v741 = vld [vmem:[%s725 + $0x78] sm:$0xff]
        %742 = vmatprep.subr.mxu0 0.0
        %743 = vmatpush1.msra.mxu0 %v726
        %744 = vmatprep.subr.mxu0 0.0
        %745 = vmatpush1.msra.mxu0 %v727
        %746 = vmatprep.subr.mxu0 0.0
        %747 = vmatpush1.msra.mxu0 %v728
        %748 = vmatprep.subr.mxu0 0.0
        %749 = vmatpush1.msra.mxu0 %v729
        %750 = vmatprep.subr.mxu0 0.0
        %751 = vmatpush1.msra.mxu0 %v730
        %752 = vmatprep.subr.mxu0 0.0
        %753 = vmatpush1.msra.mxu0 %v731
        %754 = vmatprep.subr.mxu0 0.0
        %755 = vmatpush1.msra.mxu0 %v732
        %756 = vmatprep.subr.mxu0 0.0
        %757 = vmatpush1.msra.mxu0 %v733
        %758 = vmatprep.subr.mxu0 0.0
        %759 = vmatpush1.msra.mxu0 %v734
        %760 = vmatprep.subr.mxu0 0.0
        %761 = vmatpush1.msra.mxu0 %v735
        %762 = vmatprep.subr.mxu0 0.0
        %763 = vmatpush1.msra.mxu0 %v736
        %764 = vmatprep.subr.mxu0 0.0
        %765 = vmatpush1.msra.mxu0 %v737
        %766 = vmatprep.subr.mxu0 0.0
        %767 = vmatpush1.msra.mxu0 %v738
        %768 = vmatprep.subr.mxu0 0.0
        %769 = vmatpush1.msra.mxu0 %v739
        %770 = vmatprep.subr.mxu0 0.0
        %771 = vmatpush1.msra.mxu0 %v740
        %772 = vmatprep.subr.mxu0 0.0
        %773 = vmatpush1.msra.mxu0 %v741
        %774 = vmatprep.subr.mxu0 0.0
        %775 = vmatpush1.msra.mxu0 0.0
        %776 = vmatprep.subr.mxu0 0.0
        %777 = vmatpush1.msra.mxu0 0.0
        %778 = vmatprep.subr.mxu0 0.0
        %779 = vmatpush1.msra.mxu0 0.0
        %780 = vmatprep.subr.mxu0 0.0
        %781 = vmatpush1.msra.mxu0 0.0
        %782 = vmatprep.subr.mxu0 0.0
        %783 = vmatpush1.msra.mxu0 0.0
        %784 = vmatprep.subr.mxu0 0.0
        %785 = vmatpush1.msra.mxu0 0.0
        %786 = vmatprep.subr.mxu0 0.0
        %787 = vmatpush1.msra.mxu0 0.0
        %788 = vmatprep.subr.mxu0 0.0
        %789 = vmatpush1.msra.mxu0 0.0
        %790 = vmatprep.subr.mxu0 0.0
        %791 = vmatpush1.msra.mxu0 0.0
        %792 = vmatprep.subr.mxu0 0.0
        %793 = vmatpush1.msra.mxu0 0.0
        %794 = vmatprep.subr.mxu0 0.0
        %795 = vmatpush1.msra.mxu0 0.0
        %796 = vmatprep.subr.mxu0 0.0
        %797 = vmatpush1.msra.mxu0 0.0
        %798 = vmatprep.subr.mxu0 0.0
        %799 = vmatpush1.msra.mxu0 0.0
        %800 = vmatprep.subr.mxu0 0.0
        %801 = vmatpush1.msra.mxu0 0.0
        %802 = vmatprep.subr.mxu0 0.0
        %803 = vmatpush1.msra.mxu0 0.0
        %804 = vmatprep.subr.mxu0 0.0
        %805 = vmatpush1.msra.mxu0 0.0
        %806 = vmatprep.mubr.f32.mxu0 0.0
        %807 = vmatmul.mubr.f32.gmra.mrb[0].mxu0 %v615
        %v808 = vpop.f32.mrb[0].mxu0
        %v809 = vadd.f32 0.0, %v808
        %v810 = vpop.f32.mrb[0].mxu0
        %811 = vmatprep.mubr.f32.mxu0 0.0
        %812 = vmatmul.mubr.f32.gmra.mrb[0].mxu0 %v616
        %v813 = vpop.f32.mrb[0].mxu0
        %v814 = vadd.f32 0.0, %v813
        %v815 = vpop.f32.mrb[0].mxu0
        %816 = vdwg.mxu0
        %v817 = vrot.slane %v700, 7
        %v818 = vrot.slane %v705, 7
        %v819 = vsel %vm494, %v817, %v818
        %v820 = vsel %vm494, %v818, %v817
        %v821 = vsel %vm488, %v820, 0.0
        %v822 = vsel %vm489, %v819, 0.0
        %v823 = vrot.slane %v809, 1
        %v824 = vrot.slane %v814, 1
        %v825 = vsel %vm509, %v823, %v824
        %v826 = vsel %vm509, %v824, %v823
        %v827 = vsel %vm503, %v825, 0.0
        %v828 = vsel %vm504, %v826, 0.0
        %829 = vmatprep.subr.mxu0 0.0
        %830 = vmatpush1.msra.mxu0 %v709
        %831 = vmatprep.subr.mxu0 0.0
        %832 = vmatpush1.msra.mxu0 %v710
        %833 = vmatprep.subr.mxu0 0.0
        %834 = vmatpush1.msra.mxu0 %v711
        %835 = vmatprep.subr.mxu0 0.0
        %836 = vmatpush1.msra.mxu0 %v712
        %837 = vmatprep.subr.mxu0 0.0
        %838 = vmatpush1.msra.mxu0 %v713
        %839 = vmatprep.subr.mxu0 0.0
        %840 = vmatpush1.msra.mxu0 %v714
        %841 = vmatprep.subr.mxu0 0.0
        %842 = vmatpush1.msra.mxu0 %v715
        %843 = vmatprep.subr.mxu0 0.0
        %844 = vmatpush1.msra.mxu0 %v716
        %845 = vmatprep.subr.mxu0 0.0
        %846 = vmatpush1.msra.mxu0 %v717
        %847 = vmatprep.subr.mxu0 0.0
        %848 = vmatpush1.msra.mxu0 %v718
        %849 = vmatprep.subr.mxu0 0.0
        %850 = vmatpush1.msra.mxu0 %v719
        %851 = vmatprep.subr.mxu0 0.0
        %852 = vmatpush1.msra.mxu0 %v720
        %853 = vmatprep.subr.mxu0 0.0
        %854 = vmatpush1.msra.mxu0 %v721
        %855 = vmatprep.subr.mxu0 0.0
        %856 = vmatpush1.msra.mxu0 %v722
        %857 = vmatprep.subr.mxu0 0.0
        %858 = vmatpush1.msra.mxu0 %v723
        %859 = vmatprep.subr.mxu0 0.0
        %860 = vmatpush1.msra.mxu0 %v724
        %861 = vmatprep.subr.mxu0 0.0
        %862 = vmatpush1.msra.mxu0 0.0
        %863 = vmatprep.subr.mxu0 0.0
        %864 = vmatpush1.msra.mxu0 0.0
        %865 = vmatprep.subr.mxu0 0.0
        %866 = vmatpush1.msra.mxu0 0.0
        %867 = vmatprep.subr.mxu0 0.0
        %868 = vmatpush1.msra.mxu0 0.0
        %869 = vmatprep.subr.mxu0 0.0
        %870 = vmatpush1.msra.mxu0 0.0
        %871 = vmatprep.subr.mxu0 0.0
        %872 = vmatpush1.msra.mxu0 0.0
        %873 = vmatprep.subr.mxu0 0.0
        %874 = vmatpush1.msra.mxu0 0.0
        %875 = vmatprep.subr.mxu0 0.0
        %876 = vmatpush1.msra.mxu0 0.0
        %877 = vmatprep.subr.mxu0 0.0
        %878 = vmatpush1.msra.mxu0 0.0
        %879 = vmatprep.subr.mxu0 0.0
        %880 = vmatpush1.msra.mxu0 0.0
        %881 = vmatprep.subr.mxu0 0.0
        %882 = vmatpush1.msra.mxu0 0.0
        %883 = vmatprep.subr.mxu0 0.0
        %884 = vmatpush1.msra.mxu0 0.0
        %885 = vmatprep.subr.mxu0 0.0
        %886 = vmatpush1.msra.mxu0 0.0
        %887 = vmatprep.subr.mxu0 0.0
        %888 = vmatpush1.msra.mxu0 0.0
        %889 = vmatprep.subr.mxu0 0.0
        %890 = vmatpush1.msra.mxu0 0.0
        %891 = vmatprep.subr.mxu0 0.0
        %892 = vmatpush1.msra.mxu0 0.0
        %893 = vmatprep.mubr.f32.mxu0 0.0
        %894 = vmatmul.mubr.f32.gmra.mrb[0].mxu0 %v615
        %v895 = vpop.f32.mrb[0].mxu0
        %v896 = vadd.f32 %v821, %v895
        %v897 = vpop.f32.mrb[0].mxu0
        %898 = vmatprep.mubr.f32.mxu0 0.0
        %899 = vmatmul.mubr.f32.gmra.mrb[0].mxu0 %v616
        %v900 = vpop.f32.mrb[0].mxu0
        %v901 = vadd.f32 %v822, %v900
        %v902 = vpop.f32.mrb[0].mxu0
        %903 = vdwg.mxu0
        %v904 = vadd.f32 %v896, %v827
        %v905 = vadd.f32 %v901, %v828
        %v906 = vld [vmem:[%s4] sm:$0x1]
        %v908 = vlaneseq
        %v909 = vshrl.u32 %v908, 7
        %v910 = vsub.s32 0, %v909
        %v911 = vrot.slane %v906, %v910
        %v913 = vadd.f32 %v904, %v911
        %v914 = vadd.f32 %v905, %v911
        %v915 = vadd.f32 %v913, %v612
        %v916 = vadd.f32 %v914, %v614
        %v917 = vmax.f32 %v915, 0.0
        %v918 = vmax.f32 %v916, 0.0
        %919 = vst [vmem:[%s271] sm:$0xff] %v917
        %920 = vst [vmem:[%s271 + $0x8] sm:$0xff] %v918
        %s921 = sand.u32 %s141, 1
        %s922 = scalar_lea.sflag [#allocation4], %s921
        %s923 = sand.u32 %s141, 1
        %s924 = smul.addr %s923, 16
        %s925 = scalar_lea.vmem [#allocation8], %s924
        // Predicated region
        $region53: #{tpu_custom_call.1} parent=39 // pred_check
          %p926 = pneg %p151
        $region54: #{tpu_custom_call.1} parent=39 // pred_check_branch
          %928 = sbr.rel (%p926) target = $region56
        $region55: #{tpu_custom_call.1} parent=39 // pred_region
          %s930 = ssub.s32 256, 256
          %931 = vsyncadd %s922, %s930
          %s932 = smul.addr %s23, 2
          %s933 = smul.addr %s932, 128
          %s934 = scalar_lea.hbm %s5, %s933
          %s935 = sshll.u32 %s925, 4
          %s936 = int_to_ptr.vmem [resolvable:$true] %s935
          %941 = dma.vmem_to_hbm [thread:$0]  %s936, 256, %s934, %s922, 128, 128, 8
        $region56: #{tpu_custom_call.1} parent=39 // pred_fallthru
          _
      $region40: #{tpu_custom_call.1} parent=5 // pred_fallthru
        _
      %p942 = scmp.le.s32.totalorder 2, %s18
      // Predicated region
      $region57: #{tpu_custom_call.1} parent=5 // pred_check
        %p943 = pneg %p942
      $region58: #{tpu_custom_call.1} parent=5 // pred_check_branch
        %945 = sbr.rel (%p943) target = $region60
      $region59: #{tpu_custom_call.1} parent=5 // pred_region
        %s946 = ssub.s32 %s18, 2
        // Predicated region
        $region61: #{tpu_custom_call.1} parent=59 // pred_check
          %p947 = pneg %p157
        $region62: #{tpu_custom_call.1} parent=59 // pred_check_branch
          %949 = sbr.rel (%p947) target = $region64
        $region63: #{tpu_custom_call.1} parent=59 // pred_region
          %s950 = sand.u32 %s142, 1
          %s951 = scalar_lea.sflag [#allocation4], %s950
          %s952 = sand.u32 %s142, 1
          %s953 = smul.addr %s952, 16
          %s954 = scalar_lea.vmem [#allocation8], %s953
          %955 = dma.done %s951, 256
        $region64: #{tpu_custom_call.1} parent=59 // pred_fallthru
          _
      $region60: #{tpu_custom_call.1} parent=5 // pred_fallthru
        _
    $region6: #{tpu_custom_call.1} parent=1 // loop_footer
      %s22 = sadd.s32 1, %s18
    $region7: #{tpu_custom_call.1} parent=1 // loop_footer_branch
      %17 = sbr.rel target = $region3
    $region8: #{tpu_custom_call.1} parent=1 // loop_exit
      _
    %956 = vsyncpa [#allocation3], 1
    %s957 = scalar_lea.sflag [#allocation3], 1
    %958 = vsyncpa %s957, 1
    %959 = vsyncpa [#allocation6], 1
    %960 = vsyncpa [#allocation4], 1
    %s961 = scalar_lea.sflag [#allocation4], 1
    %962 = vsyncpa %s961, 1

</llo_original>
